<compile_context>
chip_gen: v6e
topology: v6e:2x2x1
jax: 0.10.0
libtpu: 0.0.40
codegen_flags: <defaults>
</compile_context>

<pallas_src>
import jax
import jax.numpy as jnp
from jax.experimental import pallas as pl
from jax.experimental.pallas import tpu as pltpu

_LANES = 128          # lane width: batch tile must be a multiple of this
_TB_MAX = 8192        # max batch-lanes per grid step (>= ~1.3 MB/step of input)


def _round_up(x, m):
    return ((x + m - 1) // m) * m


def _choose_tile(batch, tb_max=_TB_MAX):
    """Pick (TB, Bp): batch lives on lanes, so TB is a multiple of 128.

    Keeps >= 2 grid steps whenever the padded batch allows so the "parallel"
    batch axis can be sharded across both v7x TensorCores, and sizes TB so the
    padding waste stays below one lane group per step.
    """
    bp = _round_up(max(batch, 1), _LANES)
    steps = max(-(-bp // tb_max), 1)
    if bp > _LANES:
        steps = max(steps, 2)                      # v7x: give both TCs work
    tb = _round_up(-(-bp // steps), _LANES)
    bp = steps * tb
    return tb, bp


def _deepps_kernel(packed_ref, scale_ref,
                   w1x_ref, w1a_ref, b1_ref,
                   w2_ref, b2_ref,
                   wo_ref, bo_ref,
                   out_ref):
    """Batch-in-lanes DeepPS forward for one (·, TB) batch tile.

    packed_ref : (2L + A, TB)  rows [0:L)=x^T, [L:2L)=rand^T, [2L:2L+A)=action^T
    scale_ref  : (L, 1)        std(x, dim=0, unbiased) * exp(selectors)
    w1x/w1a    : (H1, L)/(H1, A)   torch (out, in) layout, concat split
    b1/b2/wo   : (H1,1)/(H2,1)/(H2,1) columns;  bo: (1,1)
    out_ref    : (1, TB)       lane-dense output row
    """
    L = scale_ref.shape[0]
    A = w1a_ref.shape[1]

    xt = packed_ref[0:L, :]                     # (L, TB)
    rt = packed_ref[L:2 * L, :]                 # (L, TB)
    at = packed_ref[2 * L:2 * L + A, :]         # (A, TB)

    # --- Selection: sample = x + std*exp(selectors)*rand (std hoisted to wrapper) ---
    sample = xt + scale_ref[...] * rt           # (L, TB)

    # --- visible layer: Linear(L+A, H1) + ReLU; concat realized via weight split ---
    h = (jnp.dot(w1x_ref[...], sample, preferred_element_type=jnp.float32)
         + jnp.dot(w1a_ref[...], at, preferred_element_type=jnp.float32)
         + b1_ref[...])
    h = jnp.maximum(h, 0.0)                     # (H1, TB)

    # --- dense layer: Linear(H1, H2) + ReLU ---
    h = jnp.dot(w2_ref[...], h, preferred_element_type=jnp.float32) + b2_ref[...]
    h = jnp.maximum(h, 0.0)                     # (H2, TB)

    # --- output layer: Linear(H2, 1) as a sublane reduce -> lane-dense (1, TB) row ---
    out_ref[...] = (jnp.sum(h * wo_ref[...], axis=0, keepdims=True)
                    + bo_ref[...])              # (1, TB)


@jax.jit
def deepps_forward(x, rand, action, params):
    B, L = x.shape
    A = action.shape[1]
    H1 = params["b1"].shape[0]
    H2 = params["b2"].shape[0]

    if B < 2:
        # torch.std(dim=0, unbiased) is undefined for a single row; the original
        # module raises for batch size 1 as well.
        raise ValueError(f"DeepPS.forward requires batch size > 1, got {B}.")

    # --- hoisted Selection statistics: full-batch unbiased std * exp(selectors) ---
    std = jnp.std(x, axis=0, ddof=1)                               # (L,)
    scale = (std * jnp.exp(params["selectors"]))[:, None]          # (L, 1)

    # --- batch-in-lanes packing: one (2L+A, Bp) slab, batch on the lane axis ---
    TB, Bp = _choose_tile(B)
    packed = jnp.concatenate([x.T, rand.T, action.T], axis=0)      # (2L+A, B)
    if Bp != B:
        packed = jnp.pad(packed, ((0, 0), (0, Bp - B)))            # pad lanes; sliced off below

    rows = 2 * L + A

    def const_spec(r, c):
        # Full-array block with a constant index -> fetched once, VMEM-resident.
        return pl.BlockSpec((r, c), lambda i: (0, 0))

    out = pl.pallas_call(
        _deepps_kernel,
        out_shape=jax.ShapeDtypeStruct((1, Bp), jnp.float32),
        grid=(Bp // TB,),
        in_specs=[
            pl.BlockSpec((rows, TB), lambda i: (0, i)),   # packed x/rand/action tile
            const_spec(L, 1),                             # scale = std * exp(selectors)
            const_spec(H1, L),                            # w1x
            const_spec(H1, A),                            # w1a
            const_spec(H1, 1),                            # b1
            const_spec(H2, H1),                           # w2
            const_spec(H2, 1),                            # b2
            const_spec(H2, 1),                            # wo (column)
            const_spec(1, 1),                             # bo
        ],
        out_specs=pl.BlockSpec((1, TB), lambda i: (0, i)),
        compiler_params=pltpu.CompilerParams(
            dimension_semantics=("parallel",),            # shard batch tiles across TCs (v7x)
            vmem_limit_bytes=32 * 1024 * 1024,            # safe on v5e/v6e/v7x; <3 MB actually used
        ),
    )(packed, scale,
      params["w1x"], params["w1a"], params["b1"],
      params["w2"], params["b2"],
      params["wo"], params["bo"])

    return out[0, :B][:, None]                            # (B, 1)


def init_deepps_params(key, dim_latent, dim_action, dim_dense=(32, 32),
                       init_selectors=-10.0, is_predictor=False):
    """Deterministic synthetic init mirroring the PyTorch module's __init__.

    Weights are stored in torch (out, in) layout; biases as column vectors, which
    is what the batch-in-lanes kernel consumes directly.
    """
    h1, h2 = dim_dense
    k1, k2, k3, k4 = jax.random.split(key, 4)

    def kaiming_uniform(k, fan_in, shape):
        # torch.nn.init.kaiming_uniform_(mode='fan_in', nonlinearity='relu')
        bound = jnp.sqrt(6.0 / fan_in)
        return jax.random.uniform(k, shape, jnp.float32, -bound, bound)

    def bias_uniform(k, fan_in, shape):
        # torch Linear default bias init: U(-1/sqrt(fan_in), 1/sqrt(fan_in))
        bound = 1.0 / jnp.sqrt(fan_in)
        return jax.random.uniform(k, shape, jnp.float32, -bound, bound)

    fan_in1 = dim_latent + dim_action
    w1 = kaiming_uniform(k1, fan_in1, (h1, fan_in1))       # (H1, L+A) torch layout
    b1 = bias_uniform(k2, fan_in1, (h1, 1))
    w2 = kaiming_uniform(k3, h1, (h2, h1))                 # (H2, H1)
    b2 = bias_uniform(k4, h1, (h2, 1))

    # output layer: constant 1.0 weight; bias 0.0 if predictor else 1.0 (frozen)
    wo = jnp.ones((h2, 1), jnp.float32)
    bo = jnp.full((1, 1), 0.0 if is_predictor else 1.0, jnp.float32)

    return {
        "selectors": jnp.full((dim_latent,), init_selectors, jnp.float32),
        "w1x": w1[:, :dim_latent],     # (H1, L)
        "w1a": w1[:, dim_latent:],     # (H1, A)
        "b1": b1,
        "w2": w2,
        "b2": b2,
        "wo": wo,
        "bo": bo,
    }


def deepps_reference(x, rand, action, params):
    """Pure-JAX reference of the PyTorch forward (for verification)."""
    std = jnp.std(x, axis=0, ddof=1)
    sample = x + std * jnp.exp(params["selectors"]) * rand
    h = jnp.maximum(sample @ params["w1x"].T + action @ params["w1a"].T
                    + params["b1"].T, 0.0)
    h = jnp.maximum(h @ params["w2"].T + params["b2"].T, 0.0)
    return h @ params["wo"] + params["bo"]


if __name__ == "__main__":
    # Small shapes consistent with the module (forward() requires batch > 1).
    DIM_LATENT, DIM_ACTION = 16, 8
    DIM_DENSE = (32, 32)

    key = jax.random.PRNGKey(0)
    kp, kdata = jax.random.split(key)
    params = init_deepps_params(kp, DIM_LATENT, DIM_ACTION, DIM_DENSE)

    # B=8   : tiny batch, single 128-lane tile (padding path)
    # B=48  : batch not a multiple of the lane width (padding path)
    # B=300 : padded batch 512 -> TB=256, 2 grid steps (multi-step / megacore path)
    for B in (8, 48, 300):
        kx, kr, ka, kdata = jax.random.split(kdata, 4)
        x = jax.random.normal(kx, (B, DIM_LATENT), jnp.float32)
        rand = jax.random.normal(kr, (B, DIM_LATENT), jnp.float32)
        action = jax.nn.one_hot(
            jax.random.randint(ka, (B,), 0, DIM_ACTION), DIM_ACTION,
            dtype=jnp.float32)

        out = jax.block_until_ready(deepps_forward(x, rand, action, params))
        ref = deepps_reference(x, rand, action, params)
        assert out.shape == (B, 1), (B, out.shape)
        assert jnp.allclose(out, ref, atol=1e-4, rtol=1e-4), (
            B, float(jnp.max(jnp.abs(out - ref))))

    print("KERNEL_OK")
</pallas_src>

<mosaic_0001>
module attributes {stable_mosaic.version = 11 : i64} {
  func.func @_deepps_kernel(%arg0: i32, %arg1: memref<40x128xf32, #tpu.memory_space<vmem>>, %arg2: memref<16x1xf32, #tpu.memory_space<vmem>>, %arg3: memref<32x16xf32, #tpu.memory_space<vmem>>, %arg4: memref<32x8xf32, #tpu.memory_space<vmem>>, %arg5: memref<32x1xf32, #tpu.memory_space<vmem>>, %arg6: memref<32x32xf32, #tpu.memory_space<vmem>>, %arg7: memref<32x1xf32, #tpu.memory_space<vmem>>, %arg8: memref<32x1xf32, #tpu.memory_space<vmem>>, %arg9: memref<1x1xf32, #tpu.memory_space<vmem>>, %arg10: memref<1x128xf32, #tpu.memory_space<vmem>>) attributes {dimension_semantics = [#tpu.dimension_semantics<parallel>], iteration_bounds = array<i64: 1>, scalar_prefetch = 0 : i64, scratch_operands = 0 : i64, tpu.core_type = #tpu.core_type<tc>, window_params = [{transform_indices = @transform_0, window_bounds = array<i64: 40, 128>}, {pipeline_mode = #tpu.pipeline_mode<synchronous>, transform_indices = @transform_1, window_bounds = array<i64: 16, 1>}, {pipeline_mode = #tpu.pipeline_mode<synchronous>, transform_indices = @transform_2, window_bounds = array<i64: 32, 16>}, {pipeline_mode = #tpu.pipeline_mode<synchronous>, transform_indices = @transform_3, window_bounds = array<i64: 32, 8>}, {pipeline_mode = #tpu.pipeline_mode<synchronous>, transform_indices = @transform_4, window_bounds = array<i64: 32, 1>}, {pipeline_mode = #tpu.pipeline_mode<synchronous>, transform_indices = @transform_5, window_bounds = array<i64: 32, 32>}, {pipeline_mode = #tpu.pipeline_mode<synchronous>, transform_indices = @transform_6, window_bounds = array<i64: 32, 1>}, {pipeline_mode = #tpu.pipeline_mode<synchronous>, transform_indices = @transform_7, window_bounds = array<i64: 32, 1>}, {pipeline_mode = #tpu.pipeline_mode<synchronous>, transform_indices = @transform_8, window_bounds = array<i64: 1, 1>}, {transform_indices = @transform_9, window_bounds = array<i64: 1, 128>}]} {
    %c0 = arith.constant 0 : index
    %c0_0 = arith.constant 0 : index
    %0 = vector.load %arg1[%c0, %c0_0] : memref<40x128xf32, #tpu.memory_space<vmem>>, vector<16x128xf32>
    %c16 = arith.constant 16 : index
    %c0_1 = arith.constant 0 : index
    %1 = vector.load %arg1[%c16, %c0_1] : memref<40x128xf32, #tpu.memory_space<vmem>>, vector<16x128xf32>
    %c32 = arith.constant 32 : index
    %c0_2 = arith.constant 0 : index
    %2 = vector.load %arg1[%c32, %c0_2] : memref<40x128xf32, #tpu.memory_space<vmem>>, vector<8x128xf32>
    %c0_3 = arith.constant 0 : index
    %c0_4 = arith.constant 0 : index
    %3 = vector.load %arg2[%c0_3, %c0_4] : memref<16x1xf32, #tpu.memory_space<vmem>>, vector<16x1xf32>
    %4 = vector.broadcast %3 : vector<16x1xf32> to vector<16x128xf32>
    %5 = arith.mulf %4, %1 : vector<16x128xf32>
    %6 = arith.addf %0, %5 : vector<16x128xf32>
    %c0_5 = arith.constant 0 : index
    %c0_6 = arith.constant 0 : index
    %7 = vector.load %arg3[%c0_5, %c0_6] : memref<32x16xf32, #tpu.memory_space<vmem>>, vector<32x16xf32>
    %cst = arith.constant dense<0.000000e+00> : vector<32x128xf32>
    %8 = tpu.matmul %7, %6, %cst {dimension_numbers = #tpu.dot_dimension_numbers<[1], [0], [0], [1], [0, 0, 1, 1], [], []>} : vector<32x16xf32>, vector<16x128xf32>, vector<32x128xf32> -> vector<32x128xf32>
    %c0_7 = arith.constant 0 : index
    %c0_8 = arith.constant 0 : index
    %9 = vector.load %arg4[%c0_7, %c0_8] : memref<32x8xf32, #tpu.memory_space<vmem>>, vector<32x8xf32>
    %cst_9 = arith.constant dense<0.000000e+00> : vector<32x128xf32>
    %10 = tpu.matmul %9, %2, %cst_9 {dimension_numbers = #tpu.dot_dimension_numbers<[1], [0], [0], [1], [0, 0, 1, 1], [], []>} : vector<32x8xf32>, vector<8x128xf32>, vector<32x128xf32> -> vector<32x128xf32>
    %11 = arith.addf %8, %10 : vector<32x128xf32>
    %c0_10 = arith.constant 0 : index
    %c0_11 = arith.constant 0 : index
    %12 = vector.load %arg5[%c0_10, %c0_11] : memref<32x1xf32, #tpu.memory_space<vmem>>, vector<32x1xf32>
    %13 = vector.broadcast %12 : vector<32x1xf32> to vector<32x128xf32>
    %14 = arith.addf %11, %13 : vector<32x128xf32>
    %cst_12 = arith.constant 0.000000e+00 : f32
    %15 = vector.broadcast %cst_12 : f32 to vector<32x128xf32>
    %16 = arith.maximumf %14, %15 : vector<32x128xf32>
    %c0_13 = arith.constant 0 : index
    %c0_14 = arith.constant 0 : index
    %17 = vector.load %arg6[%c0_13, %c0_14] : memref<32x32xf32, #tpu.memory_space<vmem>>, vector<32x32xf32>
    %cst_15 = arith.constant dense<0.000000e+00> : vector<32x128xf32>
    %18 = tpu.matmul %17, %16, %cst_15 {dimension_numbers = #tpu.dot_dimension_numbers<[1], [0], [0], [1], [0, 0, 1, 1], [], []>} : vector<32x32xf32>, vector<32x128xf32>, vector<32x128xf32> -> vector<32x128xf32>
    %c0_16 = arith.constant 0 : index
    %c0_17 = arith.constant 0 : index
    %19 = vector.load %arg7[%c0_16, %c0_17] : memref<32x1xf32, #tpu.memory_space<vmem>>, vector<32x1xf32>
    %20 = vector.broadcast %19 : vector<32x1xf32> to vector<32x128xf32>
    %21 = arith.addf %18, %20 : vector<32x128xf32>
    %cst_18 = arith.constant 0.000000e+00 : f32
    %22 = vector.broadcast %cst_18 : f32 to vector<32x128xf32>
    %23 = arith.maximumf %21, %22 : vector<32x128xf32>
    %c0_19 = arith.constant 0 : index
    %c0_20 = arith.constant 0 : index
    %24 = vector.load %arg8[%c0_19, %c0_20] : memref<32x1xf32, #tpu.memory_space<vmem>>, vector<32x1xf32>
    %25 = vector.broadcast %24 : vector<32x1xf32> to vector<32x128xf32>
    %26 = arith.mulf %23, %25 : vector<32x128xf32>
    %cst_21 = arith.constant dense<0.000000e+00> : vector<128xf32>
    %27 = vector.multi_reduction <add>, %26, %cst_21 [0] : vector<32x128xf32> to vector<128xf32>
    %28 = vector.shape_cast %27 : vector<128xf32> to vector<1x128xf32>
    %c0_22 = arith.constant 0 : index
    %c0_23 = arith.constant 0 : index
    %29 = vector.load %arg9[%c0_22, %c0_23] : memref<1x1xf32, #tpu.memory_space<vmem>>, vector<1x1xf32>
    %30 = vector.broadcast %29 : vector<1x1xf32> to vector<1x128xf32>
    %31 = arith.addf %28, %30 : vector<1x128xf32>
    %c0_24 = arith.constant 0 : index
    %c0_25 = arith.constant 0 : index
    %32 = vector.load %arg10[%c0_24, %c0_25] : memref<1x128xf32, #tpu.memory_space<vmem>>, vector<1x128xf32>
    tpu.vector_store %arg10[%c0_24, %c0_25], %31 {strides = array<i32>} : memref<1x128xf32, #tpu.memory_space<vmem>>, vector<1x128xf32>,
    return
  }
  func.func @transform_0(%arg0: i32) -> (i32, i32) {
    %c0_i32 = arith.constant 0 : i32
    %c0_i32_0 = arith.constant 0 : i32
    return %c0_i32, %arg0 : i32, i32
  }
  func.func @transform_1(%arg0: i32) -> (i32, i32) {
    %c0_i32 = arith.constant 0 : i32
    %c0_i32_0 = arith.constant 0 : i32
    %c0_i32_1 = arith.constant 0 : i32
    return %c0_i32, %c0_i32_0 : i32, i32
  }
  func.func @transform_2(%arg0: i32) -> (i32, i32) {
    %c0_i32 = arith.constant 0 : i32
    %c0_i32_0 = arith.constant 0 : i32
    %c0_i32_1 = arith.constant 0 : i32
    return %c0_i32, %c0_i32_0 : i32, i32
  }
  func.func @transform_3(%arg0: i32) -> (i32, i32) {
    %c0_i32 = arith.constant 0 : i32
    %c0_i32_0 = arith.constant 0 : i32
    %c0_i32_1 = arith.constant 0 : i32
    return %c0_i32, %c0_i32_0 : i32, i32
  }
  func.func @transform_4(%arg0: i32) -> (i32, i32) {
    %c0_i32 = arith.constant 0 : i32
    %c0_i32_0 = arith.constant 0 : i32
    %c0_i32_1 = arith.constant 0 : i32
    return %c0_i32, %c0_i32_0 : i32, i32
  }
  func.func @transform_5(%arg0: i32) -> (i32, i32) {
    %c0_i32 = arith.constant 0 : i32
    %c0_i32_0 = arith.constant 0 : i32
    %c0_i32_1 = arith.constant 0 : i32
    return %c0_i32, %c0_i32_0 : i32, i32
  }
  func.func @transform_6(%arg0: i32) -> (i32, i32) {
    %c0_i32 = arith.constant 0 : i32
    %c0_i32_0 = arith.constant 0 : i32
    %c0_i32_1 = arith.constant 0 : i32
    return %c0_i32, %c0_i32_0 : i32, i32
  }
  func.func @transform_7(%arg0: i32) -> (i32, i32) {
    %c0_i32 = arith.constant 0 : i32
    %c0_i32_0 = arith.constant 0 : i32
    %c0_i32_1 = arith.constant 0 : i32
    return %c0_i32, %c0_i32_0 : i32, i32
  }
  func.func @transform_8(%arg0: i32) -> (i32, i32) {
    %c0_i32 = arith.constant 0 : i32
    %c0_i32_0 = arith.constant 0 : i32
    %c0_i32_1 = arith.constant 0 : i32
    return %c0_i32, %c0_i32_0 : i32, i32
  }
  func.func @transform_9(%arg0: i32) -> (i32, i32) {
    %c0_i32 = arith.constant 0 : i32
    %c0_i32_0 = arith.constant 0 : i32
    return %c0_i32, %arg0 : i32, i32
  }
}

</mosaic_0001>

<llo_original>
// kernel: deepps_forward.1
$region0: #{deepps_forward.1}
  #allocation0 [shape = 'u32[]', space=smem, size = 0x4, offset = 0x4, fixed_abs, tag = 'smem constant byte address 0x4 - core index']
  #allocation1 [shape = 'u32[144,128]{1,0:T(1,128)}', space=vmem, size = 0x12000, scoped, tag = 'internal scratch']
  #allocation2 [shape = 'f32[1,1]{1,0:T(1,128)S(1)}', space=vmem, size = 0x200, scoped, tag = 'scoped memory for deepps_forward.1']
  %s0 = inlined_call_operand.vmem [shape: f32[40,128], index: 0, kind: input, shape index: {}]
  %s1 = inlined_call_operand.vmem [shape: f32[16,1], index: 1, kind: input, shape index: {}]
  %s2 = inlined_call_operand.vmem [shape: f32[32,16], index: 2, kind: input, shape index: {}]
  %s3 = inlined_call_operand.vmem [shape: f32[32,8], index: 3, kind: input, shape index: {}]
  %s4 = inlined_call_operand.vmem [shape: f32[32,1], index: 4, kind: input, shape index: {}]
  %s5 = inlined_call_operand.vmem [shape: f32[32,32], index: 5, kind: input, shape index: {}]
  %s6 = inlined_call_operand.vmem [shape: f32[32,1], index: 6, kind: input, shape index: {}]
  %s7 = inlined_call_operand.vmem [shape: f32[32,1], index: 7, kind: input, shape index: {}]
  %s8 = inlined_call_operand.<no memory space> [shape: f32[1,1], index: 8, kind: input, shape index: {}]
  %s9 = inlined_call_operand.vmem [shape: f32[1,128], index: 9, kind: output, shape index: {}]
  %s10 = sld [smem:[#allocation0]]
  $region46: #{deepps_forward.1} parent=0
    _
  %s12 = ssub.s32 1, %s10
  %s13 = scalar_select 0, %s12, %s10
  %v14 = vstv %s8
  %15 = vst [vmem:[#allocation2] sm:$0x1] %v14
  // Predicated region
  $region2: #{deepps_forward.1} parent=0 // pred_check
    _
  $region3: #{deepps_forward.1} parent=0 // pred_check_branch
    %17 = sbr.rel (0) target = $region5
  $region4: #{deepps_forward.1} parent=0 // pred_region
    _
  $region5: #{deepps_forward.1} parent=0 // pred_fallthru
    _
  // Predicated region
  $region6: #{deepps_forward.1} parent=0 // pred_check
    _
  $region7: #{deepps_forward.1} parent=0 // pred_check_branch
    %19 = sbr.rel (0) target = $region9
  $region8: #{deepps_forward.1} parent=0 // pred_region
    _
  $region9: #{deepps_forward.1} parent=0 // pred_fallthru
    _
  // Predicated region
  $region10: #{deepps_forward.1} parent=0 // pred_check
    _
  $region11: #{deepps_forward.1} parent=0 // pred_check_branch
    %21 = sbr.rel (0) target = $region13
  $region12: #{deepps_forward.1} parent=0 // pred_region
    _
  $region13: #{deepps_forward.1} parent=0 // pred_fallthru
    _
  // Predicated region
  $region14: #{deepps_forward.1} parent=0 // pred_check
    _
  $region15: #{deepps_forward.1} parent=0 // pred_check_branch
    %23 = sbr.rel (0) target = $region17
  $region16: #{deepps_forward.1} parent=0 // pred_region
    _
  $region17: #{deepps_forward.1} parent=0 // pred_fallthru
    _
  // Predicated region
  $region18: #{deepps_forward.1} parent=0 // pred_check
    _
  $region19: #{deepps_forward.1} parent=0 // pred_check_branch
    %25 = sbr.rel (0) target = $region21
  $region20: #{deepps_forward.1} parent=0 // pred_region
    _
  $region21: #{deepps_forward.1} parent=0 // pred_fallthru
    _
  // Predicated region
  $region22: #{deepps_forward.1} parent=0 // pred_check
    _
  $region23: #{deepps_forward.1} parent=0 // pred_check_branch
    %27 = sbr.rel (0) target = $region25
  $region24: #{deepps_forward.1} parent=0 // pred_region
    _
  $region25: #{deepps_forward.1} parent=0 // pred_fallthru
    _
  // Predicated region
  $region26: #{deepps_forward.1} parent=0 // pred_check
    _
  $region27: #{deepps_forward.1} parent=0 // pred_check_branch
    %29 = sbr.rel (0) target = $region29
  $region28: #{deepps_forward.1} parent=0 // pred_region
    _
  $region29: #{deepps_forward.1} parent=0 // pred_fallthru
    _
  // Predicated region
  $region30: #{deepps_forward.1} parent=0 // pred_check
    _
  $region31: #{deepps_forward.1} parent=0 // pred_check_branch
    %31 = sbr.rel (0) target = $region33
  $region32: #{deepps_forward.1} parent=0 // pred_region
    _
  $region33: #{deepps_forward.1} parent=0 // pred_fallthru
    _
  // Predicated region
  $region34: #{deepps_forward.1} parent=0 // pred_check
    _
  $region35: #{deepps_forward.1} parent=0 // pred_check_branch
    %33 = sbr.rel (0) target = $region37
  $region36: #{deepps_forward.1} parent=0 // pred_region
    _
  $region37: #{deepps_forward.1} parent=0 // pred_fallthru
    _
  %v34 = vld [vmem:[%s0] sm:$0xff]
  %v35 = vld [vmem:[%s0 + $0x8] sm:$0xff]
  %v36 = vld [vmem:[%s0 + $0x10] sm:$0xff]
  %v37 = vld [vmem:[%s0 + $0x18] sm:$0xff]
  %v38 = vld [vmem:[%s0 + $0x20] sm:$0xff]
  %v39 = vld [vmem:[%s1] sm:$0xff]
  %v40 = vld [vmem:[%s1 + $0x8] sm:$0xff]
  %42 = vset.pattern.permute.xlu0 0
  %43 = vperm.xlu0 %42, %v39
  %v44 = vpop.permute.xlu0 %43
  %47 = vset.pattern.permute.xlu0 0
  %48 = vperm.xlu0 %47, %v40
  %v49 = vpop.permute.xlu0 %48
  %v51 = vmul.f32 %v44, %v36
  %v52 = vmul.f32 %v49, %v37
  %v53 = vadd.f32 %v34, %v51
  %v54 = vadd.f32 %v35, %v52
  %v55 = vld [vmem:[%s2] sm:$0xff]
  %v56 = vld [vmem:[%s2 + $0x8] sm:$0xff]
  %v57 = vld [vmem:[%s2 + $0x10] sm:$0xff]
  %v58 = vld [vmem:[%s2 + $0x18] sm:$0xff]
  %v59 = vld [vmem:[%s3] sm:$0xff]
  %v60 = vld [vmem:[%s3 + $0x8] sm:$0xff]
  %v61 = vld [vmem:[%s3 + $0x10] sm:$0xff]
  %v62 = vld [vmem:[%s3 + $0x18] sm:$0xff]
  %vm63 = vcmask 64512
  %v65 = vsel %vm63, %v59, 0
  %v68 = vsel %vm63, %v60, 0
  %v71 = vsel %vm63, %v61, 0
  %v74 = vsel %vm63, %v62, 0
  %76 = vmatprep.subr.mxu0 0.0
  %77 = vmatpush1.msra.mxu0 0.0
  %78 = vmatprep.subr.mxu0 0.0
  %79 = vmatpush1.msra.mxu0 0.0
  %80 = vmatprep.subr.mxu0 0.0
  %81 = vmatpush1.msra.mxu0 0.0
  %82 = vmatprep.subr.mxu0 0.0
  %83 = vmatpush1.msra.mxu0 0.0
  %84 = vmatprep.subr.mxu0 0.0
  %85 = vmatpush1.msra.mxu0 0.0
  %86 = vmatprep.subr.mxu0 0.0
  %87 = vmatpush1.msra.mxu0 0.0
  %88 = vmatprep.subr.mxu0 0.0
  %89 = vmatpush1.msra.mxu0 0.0
  %90 = vmatprep.subr.mxu0 0.0
  %91 = vmatpush1.msra.mxu0 0.0
  %92 = vmatprep.subr.mxu0 0.0
  %93 = vmatpush1.msra.mxu0 0.0
  %94 = vmatprep.subr.mxu0 0.0
  %95 = vmatpush1.msra.mxu0 0.0
  %96 = vmatprep.subr.mxu0 0.0
  %97 = vmatpush1.msra.mxu0 0.0
  %98 = vmatprep.subr.mxu0 0.0
  %99 = vmatpush1.msra.mxu0 0.0
  %100 = vmatprep.subr.mxu0 0.0
  %101 = vmatpush1.msra.mxu0 0.0
  %102 = vmatprep.subr.mxu0 0.0
  %103 = vmatpush1.msra.mxu0 0.0
  %104 = vmatprep.subr.mxu0 0.0
  %105 = vmatpush1.msra.mxu0 0.0
  %106 = vmatprep.subr.mxu0 0.0
  %107 = vmatpush1.msra.mxu0 %v38
  %108 = vmatprep.subr.mxu0 0.0
  %109 = vmatpush2.msra.mxu0 0.0
  %110 = vmatprep.subr.mxu0 0.0
  %111 = vmatpush2.msra.mxu0 0.0
  %112 = vmatprep.subr.mxu0 0.0
  %113 = vmatpush2.msra.mxu0 0.0
  %114 = vmatprep.subr.mxu0 0.0
  %115 = vmatpush2.msra.mxu0 0.0
  %116 = vmatprep.subr.mxu0 0.0
  %117 = vmatpush2.msra.mxu0 0.0
  %118 = vmatprep.subr.mxu0 0.0
  %119 = vmatpush2.msra.mxu0 0.0
  %120 = vmatprep.subr.mxu0 0.0
  %121 = vmatpush2.msra.mxu0 0.0
  %122 = vmatprep.subr.mxu0 0.0
  %123 = vmatpush2.msra.mxu0 0.0
  %124 = vmatprep.subr.mxu0 0.0
  %125 = vmatpush2.msra.mxu0 0.0
  %126 = vmatprep.subr.mxu0 0.0
  %127 = vmatpush2.msra.mxu0 0.0
  %128 = vmatprep.subr.mxu0 0.0
  %129 = vmatpush2.msra.mxu0 0.0
  %130 = vmatprep.subr.mxu0 0.0
  %131 = vmatpush2.msra.mxu0 0.0
  %132 = vmatprep.subr.mxu0 0.0
  %133 = vmatpush2.msra.mxu0 0.0
  %134 = vmatprep.subr.mxu0 0.0
  %135 = vmatpush2.msra.mxu0 0.0
  %136 = vmatprep.subr.mxu0 0.0
  %137 = vmatpush2.msra.mxu0 0.0
  %138 = vmatprep.subr.mxu0 0.0
  %139 = vmatpush2.msra.mxu0 0.0
  %140 = vmatprep.mubr.f32.mxu0 0.0
  %141 = vmatmul.mubr.f32.gmra.mxu0 %v65
  %v142 = vpop.f32.mrf.mxu0
  %v143 = vadd.f32 0.0, %v142
  %v144 = vpop.f32.mrf.mxu0
  %145 = vmatprep.mubr.f32.mxu0 0.0
  %146 = vmatmul.mubr.f32.gmra.mxu0 %v68
  %v147 = vpop.f32.mrf.mxu0
  %v148 = vadd.f32 0.0, %v147
  %v149 = vpop.f32.mrf.mxu0
  %150 = vmatprep.mubr.f32.mxu0 0.0
  %151 = vmatmul.mubr.f32.gmra.mxu0 %v71
  %v152 = vpop.f32.mrf.mxu0
  %v153 = vadd.f32 0.0, %v152
  %v154 = vpop.f32.mrf.mxu0
  %155 = vmatprep.mubr.f32.mxu0 0.0
  %156 = vmatmul.mubr.f32.gmra.mxu0 %v74
  %v157 = vpop.f32.mrf.mxu0
  %v158 = vadd.f32 0.0, %v157
  %v159 = vpop.f32.mrf.mxu0
  %160 = vdwg.mxu0
  %vm161 = vcmask 130048
  %v163 = vsel %vm161, %v55, 0
  %v166 = vsel %vm161, %v56, 0
  %v169 = vsel %vm161, %v57, 0
  %v172 = vsel %vm161, %v58, 0
  %174 = vmatprep.subr.mxu0 0.0
  %175 = vmatpush1.msra.mxu0 0.0
  %176 = vmatprep.subr.mxu0 0.0
  %177 = vmatpush1.msra.mxu0 0.0
  %178 = vmatprep.subr.mxu0 0.0
  %179 = vmatpush1.msra.mxu0 0.0
  %180 = vmatprep.subr.mxu0 0.0
  %181 = vmatpush1.msra.mxu0 0.0
  %182 = vmatprep.subr.mxu0 0.0
  %183 = vmatpush1.msra.mxu0 0.0
  %184 = vmatprep.subr.mxu0 0.0
  %185 = vmatpush1.msra.mxu0 0.0
  %186 = vmatprep.subr.mxu0 0.0
  %187 = vmatpush1.msra.mxu0 0.0
  %188 = vmatprep.subr.mxu0 0.0
  %189 = vmatpush1.msra.mxu0 0.0
  %190 = vmatprep.subr.mxu0 0.0
  %191 = vmatpush1.msra.mxu0 0.0
  %192 = vmatprep.subr.mxu0 0.0
  %193 = vmatpush1.msra.mxu0 0.0
  %194 = vmatprep.subr.mxu0 0.0
  %195 = vmatpush1.msra.mxu0 0.0
  %196 = vmatprep.subr.mxu0 0.0
  %197 = vmatpush1.msra.mxu0 0.0
  %198 = vmatprep.subr.mxu0 0.0
  %199 = vmatpush1.msra.mxu0 0.0
  %200 = vmatprep.subr.mxu0 0.0
  %201 = vmatpush1.msra.mxu0 0.0
  %202 = vmatprep.subr.mxu0 0.0
  %203 = vmatpush1.msra.mxu0 %v54
  %204 = vmatprep.subr.mxu0 0.0
  %205 = vmatpush1.msra.mxu0 %v53
  %206 = vmatprep.subr.mxu0 0.0
  %207 = vmatpush2.msra.mxu0 0.0
  %208 = vmatprep.subr.mxu0 0.0
  %209 = vmatpush2.msra.mxu0 0.0
  %210 = vmatprep.subr.mxu0 0.0
  %211 = vmatpush2.msra.mxu0 0.0
  %212 = vmatprep.subr.mxu0 0.0
  %213 = vmatpush2.msra.mxu0 0.0
  %214 = vmatprep.subr.mxu0 0.0
  %215 = vmatpush2.msra.mxu0 0.0
  %216 = vmatprep.subr.mxu0 0.0
  %217 = vmatpush2.msra.mxu0 0.0
  %218 = vmatprep.subr.mxu0 0.0
  %219 = vmatpush2.msra.mxu0 0.0
  %220 = vmatprep.subr.mxu0 0.0
  %221 = vmatpush2.msra.mxu0 0.0
  %222 = vmatprep.subr.mxu0 0.0
  %223 = vmatpush2.msra.mxu0 0.0
  %224 = vmatprep.subr.mxu0 0.0
  %225 = vmatpush2.msra.mxu0 0.0
  %226 = vmatprep.subr.mxu0 0.0
  %227 = vmatpush2.msra.mxu0 0.0
  %228 = vmatprep.subr.mxu0 0.0
  %229 = vmatpush2.msra.mxu0 0.0
  %230 = vmatprep.subr.mxu0 0.0
  %231 = vmatpush2.msra.mxu0 0.0
  %232 = vmatprep.subr.mxu0 0.0
  %233 = vmatpush2.msra.mxu0 0.0
  %234 = vmatprep.subr.mxu0 0.0
  %235 = vmatpush2.msra.mxu0 0.0
  %236 = vmatprep.subr.mxu0 0.0
  %237 = vmatpush2.msra.mxu0 0.0
  %238 = vmatprep.mubr.f32.mxu0 0.0
  %239 = vmatmul.mubr.f32.gmra.mxu0 %v163
  %v240 = vpop.f32.mrf.mxu0
  %v241 = vadd.f32 %v143, %v240
  %v242 = vpop.f32.mrf.mxu0
  %243 = vmatprep.mubr.f32.mxu0 0.0
  %244 = vmatmul.mubr.f32.gmra.mxu0 %v166
  %v245 = vpop.f32.mrf.mxu0
  %v246 = vadd.f32 %v148, %v245
  %v247 = vpop.f32.mrf.mxu0
  %248 = vmatprep.mubr.f32.mxu0 0.0
  %249 = vmatmul.mubr.f32.gmra.mxu0 %v169
  %v250 = vpop.f32.mrf.mxu0
  %v251 = vadd.f32 %v153, %v250
  %v252 = vpop.f32.mrf.mxu0
  %253 = vmatprep.mubr.f32.mxu0 0.0
  %254 = vmatmul.mubr.f32.gmra.mxu0 %v172
  %v255 = vpop.f32.mrf.mxu0
  %v256 = vadd.f32 %v158, %v255
  %v257 = vpop.f32.mrf.mxu0
  %258 = vdwg.mxu0
  %v259 = vld [vmem:[%s4] sm:$0xff]
  %v260 = vld [vmem:[%s4 + $0x8] sm:$0xff]
  %v261 = vld [vmem:[%s4 + $0x10] sm:$0xff]
  %v262 = vld [vmem:[%s4 + $0x18] sm:$0xff]
  %264 = vset.pattern.permute.xlu0 0
  %265 = vperm.xlu0 %264, %v259
  %v266 = vpop.permute.xlu0 %265
  %269 = vset.pattern.permute.xlu0 0
  %270 = vperm.xlu0 %269, %v260
  %v271 = vpop.permute.xlu0 %270
  %274 = vset.pattern.permute.xlu0 0
  %275 = vperm.xlu0 %274, %v261
  %v276 = vpop.permute.xlu0 %275
  %279 = vset.pattern.permute.xlu0 0
  %280 = vperm.xlu0 %279, %v262
  %v281 = vpop.permute.xlu0 %280
  %v283 = vadd.f32 %v241, %v266
  %v284 = vadd.f32 %v246, %v271
  %v285 = vadd.f32 %v251, %v276
  %v286 = vadd.f32 %v256, %v281
  %v287 = vmax.f32 %v283, 0.0
  %v288 = vmax.f32 %v284, 0.0
  %v289 = vmax.f32 %v285, 0.0
  %v290 = vmax.f32 %v286, 0.0
  %v291 = vld [vmem:[%s5] sm:$0xff]
  %v292 = vld [vmem:[%s5 + $0x8] sm:$0xff]
  %v293 = vld [vmem:[%s5 + $0x10] sm:$0xff]
  %v294 = vld [vmem:[%s5 + $0x18] sm:$0xff]
  %v295 = vld [vmem:[%s6] sm:$0xff]
  %v296 = vld [vmem:[%s6 + $0x8] sm:$0xff]
  %v297 = vld [vmem:[%s6 + $0x10] sm:$0xff]
  %v298 = vld [vmem:[%s6 + $0x18] sm:$0xff]
  %300 = vset.pattern.permute.xlu0 0
  %301 = vperm.xlu0 %300, %v295
  %v302 = vpop.permute.xlu0 %301
  %305 = vset.pattern.permute.xlu0 0
  %306 = vperm.xlu0 %305, %v296
  %v307 = vpop.permute.xlu0 %306
  %310 = vset.pattern.permute.xlu0 0
  %311 = vperm.xlu0 %310, %v297
  %v312 = vpop.permute.xlu0 %311
  %315 = vset.pattern.permute.xlu0 0
  %316 = vperm.xlu0 %315, %v298
  %v317 = vpop.permute.xlu0 %316
  %vm319 = vcmask 261120
  %v321 = vsel %vm319, %v291, 0
  %v324 = vsel %vm319, %v292, 0
  %v327 = vsel %vm319, %v293, 0
  %v330 = vsel %vm319, %v294, 0
  %332 = vmatprep.subr.mxu0 0.0
  %333 = vmatpush1.msra.mxu0 0.0
  %334 = vmatprep.subr.mxu0 0.0
  %335 = vmatpush1.msra.mxu0 0.0
  %336 = vmatprep.subr.mxu0 0.0
  %337 = vmatpush1.msra.mxu0 0.0
  %338 = vmatprep.subr.mxu0 0.0
  %339 = vmatpush1.msra.mxu0 0.0
  %340 = vmatprep.subr.mxu0 0.0
  %341 = vmatpush1.msra.mxu0 0.0
  %342 = vmatprep.subr.mxu0 0.0
  %343 = vmatpush1.msra.mxu0 0.0
  %344 = vmatprep.subr.mxu0 0.0
  %345 = vmatpush1.msra.mxu0 0.0
  %346 = vmatprep.subr.mxu0 0.0
  %347 = vmatpush1.msra.mxu0 0.0
  %348 = vmatprep.subr.mxu0 0.0
  %349 = vmatpush1.msra.mxu0 0.0
  %350 = vmatprep.subr.mxu0 0.0
  %351 = vmatpush1.msra.mxu0 0.0
  %352 = vmatprep.subr.mxu0 0.0
  %353 = vmatpush1.msra.mxu0 0.0
  %354 = vmatprep.subr.mxu0 0.0
  %355 = vmatpush1.msra.mxu0 0.0
  %356 = vmatprep.subr.mxu0 0.0
  %357 = vmatpush1.msra.mxu0 %v290
  %358 = vmatprep.subr.mxu0 0.0
  %359 = vmatpush1.msra.mxu0 %v289
  %360 = vmatprep.subr.mxu0 0.0
  %361 = vmatpush1.msra.mxu0 %v288
  %362 = vmatprep.subr.mxu0 0.0
  %363 = vmatpush1.msra.mxu0 %v287
  %364 = vmatprep.subr.mxu0 0.0
  %365 = vmatpush2.msra.mxu0 0.0
  %366 = vmatprep.subr.mxu0 0.0
  %367 = vmatpush2.msra.mxu0 0.0
  %368 = vmatprep.subr.mxu0 0.0
  %369 = vmatpush2.msra.mxu0 0.0
  %370 = vmatprep.subr.mxu0 0.0
  %371 = vmatpush2.msra.mxu0 0.0
  %372 = vmatprep.subr.mxu0 0.0
  %373 = vmatpush2.msra.mxu0 0.0
  %374 = vmatprep.subr.mxu0 0.0
  %375 = vmatpush2.msra.mxu0 0.0
  %376 = vmatprep.subr.mxu0 0.0
  %377 = vmatpush2.msra.mxu0 0.0
  %378 = vmatprep.subr.mxu0 0.0
  %379 = vmatpush2.msra.mxu0 0.0
  %380 = vmatprep.subr.mxu0 0.0
  %381 = vmatpush2.msra.mxu0 0.0
  %382 = vmatprep.subr.mxu0 0.0
  %383 = vmatpush2.msra.mxu0 0.0
  %384 = vmatprep.subr.mxu0 0.0
  %385 = vmatpush2.msra.mxu0 0.0
  %386 = vmatprep.subr.mxu0 0.0
  %387 = vmatpush2.msra.mxu0 0.0
  %388 = vmatprep.subr.mxu0 0.0
  %389 = vmatpush2.msra.mxu0 0.0
  %390 = vmatprep.subr.mxu0 0.0
  %391 = vmatpush2.msra.mxu0 0.0
  %392 = vmatprep.subr.mxu0 0.0
  %393 = vmatpush2.msra.mxu0 0.0
  %394 = vmatprep.subr.mxu0 0.0
  %395 = vmatpush2.msra.mxu0 0.0
  %396 = vmatprep.mubr.f32.mxu0 0.0
  %397 = vmatmul.mubr.f32.gmra.mxu0 %v321
  %v398 = vpop.f32.mrf.mxu0
  %v399 = vadd.f32 %v302, %v398
  %v400 = vpop.f32.mrf.mxu0
  %401 = vmatprep.mubr.f32.mxu0 0.0
  %402 = vmatmul.mubr.f32.gmra.mxu0 %v324
  %v403 = vpop.f32.mrf.mxu0
  %v404 = vadd.f32 %v307, %v403
  %v405 = vpop.f32.mrf.mxu0
  %406 = vmatprep.mubr.f32.mxu0 0.0
  %407 = vmatmul.mubr.f32.gmra.mxu0 %v327
  %v408 = vpop.f32.mrf.mxu0
  %v409 = vadd.f32 %v312, %v408
  %v410 = vpop.f32.mrf.mxu0
  %411 = vmatprep.mubr.f32.mxu0 0.0
  %412 = vmatmul.mubr.f32.gmra.mxu0 %v330
  %v413 = vpop.f32.mrf.mxu0
  %v414 = vadd.f32 %v317, %v413
  %v415 = vpop.f32.mrf.mxu0
  %416 = vdwg.mxu0
  %v417 = vmax.f32 %v399, 0.0
  %v418 = vmax.f32 %v404, 0.0
  %v419 = vmax.f32 %v409, 0.0
  %v420 = vmax.f32 %v414, 0.0
  %v421 = vld [vmem:[%s7] sm:$0xff]
  %v422 = vld [vmem:[%s7 + $0x8] sm:$0xff]
  %v423 = vld [vmem:[%s7 + $0x10] sm:$0xff]
  %v424 = vld [vmem:[%s7 + $0x18] sm:$0xff]
  %426 = vset.pattern.permute.xlu0 0
  %427 = vperm.xlu0 %426, %v421
  %v428 = vpop.permute.xlu0 %427
  %431 = vset.pattern.permute.xlu0 0
  %432 = vperm.xlu0 %431, %v422
  %v433 = vpop.permute.xlu0 %432
  %436 = vset.pattern.permute.xlu0 0
  %437 = vperm.xlu0 %436, %v423
  %v438 = vpop.permute.xlu0 %437
  %441 = vset.pattern.permute.xlu0 0
  %442 = vperm.xlu0 %441, %v424
  %v443 = vpop.permute.xlu0 %442
  %v445 = vmul.f32 %v417, %v428
  %v446 = vmul.f32 %v418, %v433
  %v447 = vmul.f32 %v419, %v438
  %v448 = vmul.f32 %v420, %v443
  %v449 = vadd.f32 %v445, %v446
  %v450 = vadd.f32 %v449, %v447
  %v451 = vadd.f32 %v450, %v448
  %v452 = vrot.slane %v451, 4
  %v453 = vadd.f32 %v451, %v452
  %v454 = vrot.slane %v453, 2
  %v455 = vadd.f32 %v453, %v454
  %v456 = vrot.slane %v455, 1
  %v457 = vadd.f32 %v455, %v456
  %v458 = vld [vmem:[#allocation2] sm:$0x1]
  %460 = vset.pattern.permute.xlu0 0
  %461 = vperm.xlu0 %460, %v458
  %v462 = vpop.permute.xlu0 %461
  %v464 = vlaneseq
  %v465 = vshrl.u32 %v464, 7
  %v466 = vsub.s32 0, %v465
  %v467 = vrot.slane %v462, %v466
  %v468 = vadd.f32 %v457, %v467
  %469 = vst [vmem:[%s9] sm:$0x1] %v468
  // Predicated region
  $region38: #{deepps_forward.1} parent=0 // pred_check
    _
  $region39: #{deepps_forward.1} parent=0 // pred_check_branch
    %471 = sbr.rel (0) target = $region41
  $region40: #{deepps_forward.1} parent=0 // pred_region
    _
  $region41: #{deepps_forward.1} parent=0 // pred_fallthru
    _
  // Predicated region
  $region42: #{deepps_forward.1} parent=0 // pred_check
    _
  $region43: #{deepps_forward.1} parent=0 // pred_check_branch
    %473 = sbr.rel (0) target = $region45
  $region44: #{deepps_forward.1} parent=0 // pred_region
    _
  $region45: #{deepps_forward.1} parent=0 // pred_fallthru
    _

</llo_original>
